<compile_context>
chip_gen: v7x
topology: tpu7x:2x2x1
jax: 0.10.0
libtpu: 0.0.40
codegen_flags: <defaults>
</compile_context>

<pallas_src>
import jax
import jax.numpy as jnp
from jax.experimental import pallas as pl
from jax.experimental.pallas import tpu as pltpu


def _round_up(a: int, b: int) -> int:
    return ((a + b - 1) // b) * b


def _sublane_multiple(dtype) -> int:
    # f32 -> 8, bf16/f16 -> 16, int8/fp8 -> 32 (packed sublane minimum tiles).
    return max(8, 32 // jnp.dtype(dtype).itemsize)


def _vmem_ceiling_bytes() -> int:
    """Per-generation scoped-VMEM ceiling, with headroom under physical VMEM."""
    cap = None
    try:
        info = pltpu.get_tpu_info()
        cap = getattr(info, "vmem_capacity_bytes", None)
    except Exception:
        cap = None
    if cap is None:
        return 48 << 20                      # unknown: be v7x-safe (64 MiB phys)
    if cap >= (100 << 20):                   # v5e / v6e: 128 MiB physical
        return 100 << 20
    return min(48 << 20, int(cap) * 3 // 4)  # v7x: 64 MiB physical


def _make_linear_relu_kernel(has_bias: bool, use_scratch_acc: bool):
    """Fused matmul + bias + ReLU kernel body."""

    def kernel(*refs):
        if use_scratch_acc:
            acc_ref = refs[-1]
            io = refs[:-1]
        else:
            acc_ref = None
            io = refs
        if has_bias:
            x_ref, w_ref, b_ref, o_ref = io
        else:
            x_ref, w_ref, o_ref = io
            b_ref = None

        # float32 output blocks are resident across k (same (i, j) block index),
        # so they can act as the accumulator directly.
        acc = acc_ref if use_scratch_acc else o_ref

        k = pl.program_id(2)

        @pl.when(k == 0)
        def _init():
            acc[...] = jnp.zeros_like(acc)

        # x tile: (tm, tk), w tile: (tk, tn)  — MXU-native (M,K)x(K,N).
        acc[...] += jnp.dot(x_ref[...], w_ref[...],
                            preferred_element_type=jnp.float32)

        @pl.when(k == pl.num_programs(2) - 1)
        def _finalize():
            r = acc[...]
            if has_bias:
                r = r + b_ref[...]          # bias stays float32
            o_ref[...] = jnp.maximum(r, 0.0).astype(o_ref.dtype)

    return kernel


def _xla_linear_relu(x, w_kn, bias, out_dtype):
    y = jnp.einsum("...k,kn->...n",
                   x.astype(jnp.float32), w_kn.astype(jnp.float32),
                   precision=jax.lax.Precision.HIGHEST)
    if bias is not None:
        y = y + bias.astype(jnp.float32)
    return jnp.maximum(y, 0.0).astype(out_dtype)


_TINY_MAC_THRESHOLD = 1 << 21    # below ~2M MACs plain XLA is strictly faster


def ipex_linear_relu(x, weight, bias=None, *,
                     tm=None, tn=None, tk=None,
                     compute_dtype=None,
                     weight_is_kn=False,
                     force_pallas=False):
    """Fused y = relu(x @ W.T + b).

    x:      (..., in_features)
    weight: (out_features, in_features) PyTorch layout, or (in_features,
            out_features) when weight_is_kn=True (pre-transposed, cacheable).
    bias:   (out_features,) or None.
    compute_dtype: optional MXU operand dtype (e.g. jnp.bfloat16); cast is done
            in the wrapper so HBM DMA bytes are halved too. Accumulation stays
            float32 and the output keeps x.dtype.
    """
    out_dtype = x.dtype
    if weight_is_kn:
        in_features, out_features = weight.shape
        w_kn = weight
    else:
        out_features, in_features = weight.shape
        w_kn = weight.T       # one-time (K, N) transform; cache it for inference
    assert x.shape[-1] == in_features

    orig_lead = x.shape[:-1]
    m = 1
    for d in orig_lead:
        m *= d

    # ---- tiny-shape fallback ------------------------------------------------
    if not force_pallas and m * out_features * in_features < _TINY_MAC_THRESHOLD:
        return _xla_linear_relu(x, w_kn, bias, out_dtype)

    op_dtype = jnp.dtype(compute_dtype) if compute_dtype is not None \
        else jnp.dtype(x.dtype)
    op_itemsize = op_dtype.itemsize
    out_itemsize = jnp.dtype(out_dtype).itemsize

    x2d = x.reshape(m, in_features)
    if x2d.dtype != op_dtype:
        x2d = x2d.astype(op_dtype)      # wrapper-side cast: halves DMA bytes
    if w_kn.dtype != op_dtype:
        w_kn = w_kn.astype(op_dtype)

    # ---- tile-size selection --------------------------------------------------
    sub = _sublane_multiple(op_dtype)
    if tm is None:
        tm = 512
    if tn is None:
        tn = 1024 if op_itemsize <= 2 else 512
    if tk is None:
        tk = 2048

    tm_ = min(tm, _round_up(m, sub))
    tn_ = min(tn, _round_up(out_features, 256))
    tk_ = min(tk, _round_up(in_features, 256))

    mp = _round_up(m, tm_)
    np_ = _round_up(out_features, tn_)
    kp = _round_up(in_features, tk_)

    # Megacore: ensure >= 2 parallel output tiles for small problems (v7x 2 TC).
    if mp // tm_ == 1 and np_ // tn_ == 1 and tn_ >= 512 and tn_ % 512 == 0:
        tn_ //= 2
        np_ = _round_up(out_features, tn_)

    grid = (mp // tm_, np_ // tn_, kp // tk_)

    # ---- zero-pad to tile multiples (K padding contributes zeros) -------------
    if (mp, kp) != (m, in_features):
        x2d = jnp.pad(x2d, ((0, mp - m), (0, kp - in_features)))
    if (kp, np_) != (in_features, out_features):
        w_kn = jnp.pad(w_kn, ((0, kp - in_features), (0, np_ - out_features)))

    has_bias = bias is not None
    operands = [x2d, w_kn]
    if has_bias:
        b_row = bias.astype(jnp.float32).reshape(1, out_features)
        if np_ != out_features:
            b_row = jnp.pad(b_row, ((0, 0), (0, np_ - out_features)))
        operands.append(b_row)

    # ---- BlockSpecs -----------------------------------------------------------
    x_spec = pl.BlockSpec((tm_, tk_), lambda i, j, k: (i, k))
    w_index_map = lambda i, j, k: (k, j)

    # Skinny-M (decode-style): deepen the weight-stream pipeline.
    deep_weight = (grid[0] == 1) and (grid[1] * grid[2] >= 3)
    w_buffers = 2
    if deep_weight:
        try:
            w_spec = pl.BlockSpec((tk_, tn_), w_index_map,
                                  pipeline_mode=pl.Buffered(3))
            w_buffers = 3
        except (TypeError, AttributeError):
            w_spec = pl.BlockSpec((tk_, tn_), w_index_map)
    else:
        w_spec = pl.BlockSpec((tk_, tn_), w_index_map)

    in_specs = [x_spec, w_spec]
    if has_bias:
        in_specs.append(pl.BlockSpec((1, tn_), lambda i, j, k: (0, j)))
    out_spec = pl.BlockSpec((tm_, tn_), lambda i, j, k: (i, j))

    # f32 outputs accumulate directly into the output block; otherwise use a
    # float32 scratch accumulator and downcast at the final K step.
    use_scratch_acc = jnp.dtype(out_dtype) != jnp.dtype(jnp.float32)
    scratch_shapes = ([pltpu.VMEM((tm_, tn_), jnp.float32)]
                      if use_scratch_acc else [])

    # ---- VMEM budget ----------------------------------------------------------
    vmem_est = (2 * tm_ * tk_ * op_itemsize             # x (double-buffered)
                + w_buffers * tk_ * tn_ * op_itemsize   # weight stream
                + 2 * tm_ * tn_ * out_itemsize          # output
                + (tm_ * tn_ * 4 if use_scratch_acc else 0)
                + (2 * tn_ * 4 if has_bias else 0))
    vmem_limit = int(min(max(vmem_est + vmem_est // 2 + (4 << 20), 32 << 20),
                         _vmem_ceiling_bytes()))

    cost = pl.CostEstimate(
        flops=2 * mp * np_ * kp,
        transcendentals=0,
        bytes_accessed=((mp * kp) * (np_ // tn_) + (kp * np_) * (mp // tm_))
                       * op_itemsize
                       + mp * np_ * out_itemsize
                       + (np_ * 4 if has_bias else 0),
    )

    out2d = pl.pallas_call(
        _make_linear_relu_kernel(has_bias, use_scratch_acc),
        out_shape=jax.ShapeDtypeStruct((mp, np_), out_dtype),
        grid_spec=pltpu.PrefetchScalarGridSpec(
            num_scalar_prefetch=0,
            grid=grid,
            in_specs=in_specs,
            out_specs=out_spec,
            scratch_shapes=scratch_shapes,
        ),
        compiler_params=pltpu.CompilerParams(
            dimension_semantics=("parallel", "parallel", "arbitrary"),
            vmem_limit_bytes=vmem_limit,
        ),
        cost_estimate=cost,
    )(*operands)

    out2d = out2d[:m, :out_features]
    return out2d.reshape(*orig_lead, out_features)


if __name__ == "__main__":
    key = jax.random.PRNGKey(0)
    k1, k2, k3, k4, k5, k6, k7, k8, k9 = jax.random.split(key, 9)

    def linear_params(kw, kb, n, kdim, dtype=jnp.float32):
        bound = 1.0 / (kdim ** 0.5)
        w = jax.random.uniform(kw, (n, kdim), dtype=jnp.float32,
                               minval=-bound, maxval=bound).astype(dtype)
        b = jax.random.uniform(kb, (n,), dtype=jnp.float32,
                               minval=-bound, maxval=bound).astype(dtype)
        return w, b

    def ref(x, w, b):
        y = jnp.einsum("...k,nk->...n",
                       x.astype(jnp.float32), w.astype(jnp.float32),
                       precision=jax.lax.Precision.HIGHEST)
        if b is not None:
            y = y + b.astype(jnp.float32)
        return jnp.maximum(y, 0.0)

    ok = True

    # 1) Tiny, module-consistent shapes (batch=2, seq=8, 32 -> 64 features).
    #    Default path takes the XLA fallback; force the Pallas kernel too to
    #    validate the padded-tile path (with and without bias).
    B, S, K, N = 2, 8, 32, 64
    x = jax.random.normal(k1, (B, S, K), dtype=jnp.float32)
    w, b = linear_params(k2, k3, N, K)
    y_ref = ref(x, w, b)
    y0 = jax.block_until_ready(ipex_linear_relu(x, w, b))
    y1 = jax.block_until_ready(ipex_linear_relu(x, w, b, force_pallas=True))
    y2 = jax.block_until_ready(ipex_linear_relu(x, w, None, force_pallas=True))
    assert y1.shape == (B, S, N)
    ok &= bool(jnp.allclose(y0, y_ref, atol=1e-5, rtol=1e-5))
    ok &= bool(jnp.allclose(y1, y_ref, atol=1e-4, rtol=1e-4))
    ok &= bool(jnp.allclose(y2, ref(x, w, None), atol=1e-4, rtol=1e-4))

    # 2) Moderate f32 shape exercising the main tiled path (and the megacore
    #    tn split), plus the wrapper-side bf16 compute cast.
    B, S, K, N = 2, 256, 512, 512
    x = jax.random.normal(k4, (B, S, K), dtype=jnp.float32)
    w, b = linear_params(k5, k6, N, K)
    y_ref = ref(x, w, b)
    y = jax.block_until_ready(ipex_linear_relu(x, w, b))
    ok &= bool(jnp.allclose(y, y_ref, atol=1e-3, rtol=1e-3))
    y_bf = jax.block_until_ready(
        ipex_linear_relu(x, w, b, compute_dtype=jnp.bfloat16))
    ok &= bool(jnp.allclose(y_bf, y_ref, atol=5e-2, rtol=5e-2))

    # 3) Skinny-M (decode-style) bf16 path: packed (16,*) sublane tile,
    #    Buffered(3) weight stream, f32 scratch accumulator for bf16 output.
    B, S, K, N = 1, 8, 1024, 4096
    xb = jax.random.normal(k7, (B, S, K), dtype=jnp.float32).astype(jnp.bfloat16)
    wb, bb = linear_params(k8, k9, N, K, dtype=jnp.bfloat16)
    yb = jax.block_until_ready(ipex_linear_relu(xb, wb, bb))
    yb_ref = ref(xb, wb, bb)
    assert yb.dtype == jnp.bfloat16 and yb.shape == (B, S, N)
    ok &= bool(jnp.allclose(yb.astype(jnp.float32), yb_ref,
                            atol=3e-2, rtol=3e-2))

    # TODO(synk): the IPEX tpp / woq dispatch flags select alternate CPU GEMM
    # backends; the math is identical so they map to this same kernel.

    if not ok:
        raise SystemExit("numerical mismatch")
    print("KERNEL_OK")
</pallas_src>

<mosaic_0001>
module attributes {stable_mosaic.version = 11 : i64} {
  func.func @kernel(%arg0: i32, %arg1: i32, %arg2: i32, %arg3: memref<16x256xf32, #tpu.memory_space<vmem>>, %arg4: memref<256x256xf32, #tpu.memory_space<vmem>>, %arg5: memref<1x256xf32, #tpu.memory_space<vmem>>, %arg6: memref<16x256xf32, #tpu.memory_space<vmem>>) attributes {dimension_semantics = [#tpu.dimension_semantics<parallel>, #tpu.dimension_semantics<parallel>, #tpu.dimension_semantics<arbitrary>], iteration_bounds = array<i64: 1, 1, 1>, scalar_prefetch = 0 : i64, scratch_operands = 0 : i64, tpu.core_type = #tpu.core_type<tc>, window_params = [{transform_indices = @transform_0, window_bounds = array<i64: 16, 256>}, {transform_indices = @transform_1, window_bounds = array<i64: 256, 256>}, {transform_indices = @transform_2, window_bounds = array<i64: 1, 256>}, {transform_indices = @transform_3, window_bounds = array<i64: 16, 256>}]} {
    %c0_i32 = arith.constant 0 : i32
    %0 = arith.cmpi eq, %arg2, %c0_i32 : i32
    %1 = arith.extui %0 : i1 to i32
    %c0_i32_0 = arith.constant 0 : i32
    %2 = arith.cmpi ne, %1, %c0_i32_0 : i32
    scf.if %2 {
      %cst_10 = arith.constant 0.000000e+00 : f32
      %12 = vector.broadcast %cst_10 : f32 to vector<16x256xf32>
      %c0_11 = arith.constant 0 : index
      %c0_12 = arith.constant 0 : index
      %13 = vector.load %arg6[%c0_11, %c0_12] : memref<16x256xf32, #tpu.memory_space<vmem>>, vector<16x256xf32>
      tpu.vector_store %arg6[%c0_11, %c0_12], %12 {strides = array<i32>} : memref<16x256xf32, #tpu.memory_space<vmem>>, vector<16x256xf32>,
    } else {
    }
    %c0 = arith.constant 0 : index
    %c0_1 = arith.constant 0 : index
    %3 = vector.load %arg6[%c0, %c0_1] : memref<16x256xf32, #tpu.memory_space<vmem>>, vector<16x256xf32>
    %c0_2 = arith.constant 0 : index
    %c0_3 = arith.constant 0 : index
    %4 = vector.load %arg3[%c0_2, %c0_3] : memref<16x256xf32, #tpu.memory_space<vmem>>, vector<16x256xf32>
    %c0_4 = arith.constant 0 : index
    %c0_5 = arith.constant 0 : index
    %5 = vector.load %arg4[%c0_4, %c0_5] : memref<256x256xf32, #tpu.memory_space<vmem>>, vector<256x256xf32>
    %cst = arith.constant dense<0.000000e+00> : vector<16x256xf32>
    %6 = tpu.matmul %4, %5, %cst {dimension_numbers = #tpu.dot_dimension_numbers<[1], [0], [0], [1], [0, 0, 1, 1], [], []>} : vector<16x256xf32>, vector<256x256xf32>, vector<16x256xf32> -> vector<16x256xf32>
    %7 = arith.addf %3, %6 : vector<16x256xf32>
    %c0_6 = arith.constant 0 : index
    %c0_7 = arith.constant 0 : index
    %8 = vector.load %arg6[%c0_6, %c0_7] : memref<16x256xf32, #tpu.memory_space<vmem>>, vector<16x256xf32>
    tpu.vector_store %arg6[%c0_6, %c0_7], %7 {strides = array<i32>} : memref<16x256xf32, #tpu.memory_space<vmem>>, vector<16x256xf32>,
    %c0_i32_8 = arith.constant 0 : i32
    %9 = arith.cmpi eq, %arg2, %c0_i32_8 : i32
    %10 = arith.extui %9 : i1 to i32
    %c0_i32_9 = arith.constant 0 : i32
    %11 = arith.cmpi ne, %10, %c0_i32_9 : i32
    scf.if %11 {
      %c0_10 = arith.constant 0 : index
      %c0_11 = arith.constant 0 : index
      %12 = vector.load %arg6[%c0_10, %c0_11] : memref<16x256xf32, #tpu.memory_space<vmem>>, vector<16x256xf32>
      %c0_12 = arith.constant 0 : index
      %c0_13 = arith.constant 0 : index
      %13 = vector.load %arg5[%c0_12, %c0_13] : memref<1x256xf32, #tpu.memory_space<vmem>>, vector<1x256xf32>
      %14 = vector.broadcast %13 : vector<1x256xf32> to vector<16x256xf32>
      %15 = arith.addf %12, %14 : vector<16x256xf32>
      %cst_14 = arith.constant 0.000000e+00 : f32
      %16 = vector.broadcast %cst_14 : f32 to vector<16x256xf32>
      %17 = arith.maximumf %15, %16 : vector<16x256xf32>
      %c0_15 = arith.constant 0 : index
      %c0_16 = arith.constant 0 : index
      %18 = vector.load %arg6[%c0_15, %c0_16] : memref<16x256xf32, #tpu.memory_space<vmem>>, vector<16x256xf32>
      tpu.vector_store %arg6[%c0_15, %c0_16], %17 {strides = array<i32>} : memref<16x256xf32, #tpu.memory_space<vmem>>, vector<16x256xf32>,
    } else {
    }
    return
  }
  func.func @transform_0(%arg0: i32, %arg1: i32, %arg2: i32) -> (i32, i32) {
    %c0_i32 = arith.constant 0 : i32
    return %arg0, %arg2 : i32, i32
  }
  func.func @transform_1(%arg0: i32, %arg1: i32, %arg2: i32) -> (i32, i32) {
    %c0_i32 = arith.constant 0 : i32
    return %arg2, %arg1 : i32, i32
  }
  func.func @transform_2(%arg0: i32, %arg1: i32, %arg2: i32) -> (i32, i32) {
    %c0_i32 = arith.constant 0 : i32
    %c0_i32_0 = arith.constant 0 : i32
    return %c0_i32, %arg1 : i32, i32
  }
  func.func @transform_3(%arg0: i32, %arg1: i32, %arg2: i32) -> (i32, i32) {
    %c0_i32 = arith.constant 0 : i32
    return %arg0, %arg1 : i32, i32
  }
}

</mosaic_0001>

<llo_original>
// kernel: tpu_custom_call.1
$region0: #{tpu_custom_call.1}
  #allocation0 [shape = 'u32[]', space=smem, size = 0x4, offset = 0x4, fixed_abs, tag = 'smem constant byte address 0x4 - core index']
  #allocation1 [shape = 'u32[144,128]{1,0:T(1,128)}', space=vmem, size = 0x12000, scoped, tag = 'internal scratch']
  %s0 = inlined_call_operand.hbm [shape: f32[16,256], index: 0, kind: input, shape index: {}]
  %s1 = inlined_call_operand.hbm [shape: f32[256,256], index: 1, kind: input, shape index: {}]
  %s2 = inlined_call_operand.vmem [shape: f32[1,256], index: 2, kind: input, shape index: {}]
  %s3 = inlined_call_operand.hbm [shape: f32[16,256], index: 3, kind: output, shape index: {}]
  %s4 = sld [smem:[#allocation0]]
  $region38: #{tpu_custom_call.1} parent=0
    _
  %s6 = ssub.s32 1, %s4
  %s7 = scalar_select 0, %s6, %s4
  $region1: #{tpu_custom_call.1} parent=0
    #allocation2 [shape = 'u8[16384]{0}', space=vmem, size = 0x4000, scoped, tag = 'input window, operand 0, single buffered']
    #allocation3 [shape = 's32[1]{0}', space=sflag, size = 0x4, scoped, tag = 'scoped memory for tpu_custom_call.1']
    #allocation4 [shape = 's32[1]{0}', space=sflag, size = 0x4, scoped, tag = 'scoped memory for tpu_custom_call.1']
    #allocation5 [shape = 'u8[262144]{0}', space=vmem, size = 0x40000, scoped, tag = 'input window, operand 1, single buffered']
    #allocation6 [shape = 's32[1]{0}', space=sflag, size = 0x4, scoped, tag = 'scoped memory for tpu_custom_call.1']
    #allocation7 [shape = 'u8[16384]{0}', space=vmem, size = 0x4000, scoped, tag = 'output window, operand 0, single buffered']
    %8 = vsyncpa [#allocation3], 0
    %9 = vsyncpa [#allocation6], 0
    %10 = vsyncpa [#allocation4], 0
    // Predicated region
    $region2: #{tpu_custom_call.1} parent=1 // pred_check
      _
    $region3: #{tpu_custom_call.1} parent=1 // pred_check_branch
      %12 = sbr.rel (0) target = $region5
    $region4: #{tpu_custom_call.1} parent=1 // pred_region
      %s14 = ssub.s32 512, 512
      %15 = vsyncadd [#allocation3], %s14
      %s16 = sshll.u32 [#allocation2], 4
      %s17 = int_to_ptr.vmem [resolvable:$true] %s16
      %22 = dma.hbm_to_vmem [thread:$0]  %s0, 512, %s17, [#allocation3], 256, 256, 16
    $region5: #{tpu_custom_call.1} parent=1 // pred_fallthru
      _
    // Predicated region
    $region6: #{tpu_custom_call.1} parent=1 // pred_check
      _
    $region7: #{tpu_custom_call.1} parent=1 // pred_check_branch
      %24 = sbr.rel (0) target = $region9
    $region8: #{tpu_custom_call.1} parent=1 // pred_region
      %s26 = ssub.s32 8192, 8192
      %27 = vsyncadd [#allocation6], %s26
      %s28 = sshll.u32 [#allocation5], 4
      %s29 = int_to_ptr.vmem [resolvable:$true] %s28
      %34 = dma.hbm_to_vmem [thread:$0]  %s1, 8192, %s29, [#allocation6], 256, 256, 16
    $region9: #{tpu_custom_call.1} parent=1 // pred_fallthru
      _
    // Predicated region
    $region10: #{tpu_custom_call.1} parent=1 // pred_check
      _
    $region11: #{tpu_custom_call.1} parent=1 // pred_check_branch
      %36 = sbr.rel (0) target = $region13
    $region12: #{tpu_custom_call.1} parent=1 // pred_region
      _
    $region13: #{tpu_custom_call.1} parent=1 // pred_fallthru
      _
    // Predicated region
    $region14: #{tpu_custom_call.1} parent=1 // pred_check
      _
    $region15: #{tpu_custom_call.1} parent=1 // pred_check_branch
      %38 = sbr.rel (0) target = $region17
    $region16: #{tpu_custom_call.1} parent=1 // pred_region
      %39 = dma.done [#allocation3], 512
    $region17: #{tpu_custom_call.1} parent=1 // pred_fallthru
      _
    // Predicated region
    $region18: #{tpu_custom_call.1} parent=1 // pred_check
      _
    $region19: #{tpu_custom_call.1} parent=1 // pred_check_branch
      %41 = sbr.rel (0) target = $region21
    $region20: #{tpu_custom_call.1} parent=1 // pred_region
      %42 = dma.done [#allocation6], 8192
    $region21: #{tpu_custom_call.1} parent=1 // pred_fallthru
      _
    %p43 = scmp.eq.s32.totalorder 0, 0
    // Predicated region
    $region22: #{tpu_custom_call.1} parent=1 // pred_check
      %p44 = pneg %p43
    $region23: #{tpu_custom_call.1} parent=1 // pred_check_branch
      %46 = sbr.rel (%p44) target = $region25
    $region24: #{tpu_custom_call.1} parent=1 // pred_region
      %47 = vst [vmem:[#allocation7] sm:$0xff] 0.0
      %48 = vst [vmem:[#allocation7 + $0x8] sm:$0xff] 0.0
      %49 = vst [vmem:[#allocation7 + $0x10] sm:$0xff] 0.0
      %50 = vst [vmem:[#allocation7 + $0x18] sm:$0xff] 0.0
    $region25: #{tpu_custom_call.1} parent=1 // pred_fallthru
      _
    %v51 = vld [vmem:[#allocation7] sm:$0xff]
    %v52 = vld [vmem:[#allocation7 + $0x8] sm:$0xff]
    %v53 = vld [vmem:[#allocation7 + $0x10] sm:$0xff]
    %v54 = vld [vmem:[#allocation7 + $0x18] sm:$0xff]
    %v55 = vld [vmem:[#allocation2] sm:$0xff]
    %v56 = vld [vmem:[#allocation2 + $0x8] sm:$0xff]
    %v57 = vld [vmem:[#allocation2 + $0x10] sm:$0xff]
    %v58 = vld [vmem:[#allocation2 + $0x18] sm:$0xff]
    %v59 = vld [vmem:[#allocation5] sm:$0xff]
    %v60 = vld [vmem:[#allocation5 + $0x8] sm:$0xff]
    %v61 = vld [vmem:[#allocation5 + $0x10] sm:$0xff]
    %v62 = vld [vmem:[#allocation5 + $0x18] sm:$0xff]
    %v63 = vld [vmem:[#allocation5 + $0x20] sm:$0xff]
    %v64 = vld [vmem:[#allocation5 + $0x28] sm:$0xff]
    %v65 = vld [vmem:[#allocation5 + $0x30] sm:$0xff]
    %v66 = vld [vmem:[#allocation5 + $0x38] sm:$0xff]
    %v67 = vld [vmem:[#allocation5 + $0x40] sm:$0xff]
    %v68 = vld [vmem:[#allocation5 + $0x48] sm:$0xff]
    %v69 = vld [vmem:[#allocation5 + $0x50] sm:$0xff]
    %v70 = vld [vmem:[#allocation5 + $0x58] sm:$0xff]
    %v71 = vld [vmem:[#allocation5 + $0x60] sm:$0xff]
    %v72 = vld [vmem:[#allocation5 + $0x68] sm:$0xff]
    %v73 = vld [vmem:[#allocation5 + $0x70] sm:$0xff]
    %v74 = vld [vmem:[#allocation5 + $0x78] sm:$0xff]
    %v75 = vld [vmem:[#allocation5 + $0x80] sm:$0xff]
    %v76 = vld [vmem:[#allocation5 + $0x88] sm:$0xff]
    %v77 = vld [vmem:[#allocation5 + $0x90] sm:$0xff]
    %v78 = vld [vmem:[#allocation5 + $0x98] sm:$0xff]
    %v79 = vld [vmem:[#allocation5 + $0xa0] sm:$0xff]
    %v80 = vld [vmem:[#allocation5 + $0xa8] sm:$0xff]
    %v81 = vld [vmem:[#allocation5 + $0xb0] sm:$0xff]
    %v82 = vld [vmem:[#allocation5 + $0xb8] sm:$0xff]
    %v83 = vld [vmem:[#allocation5 + $0xc0] sm:$0xff]
    %v84 = vld [vmem:[#allocation5 + $0xc8] sm:$0xff]
    %v85 = vld [vmem:[#allocation5 + $0xd0] sm:$0xff]
    %v86 = vld [vmem:[#allocation5 + $0xd8] sm:$0xff]
    %v87 = vld [vmem:[#allocation5 + $0xe0] sm:$0xff]
    %v88 = vld [vmem:[#allocation5 + $0xe8] sm:$0xff]
    %v89 = vld [vmem:[#allocation5 + $0xf0] sm:$0xff]
    %v90 = vld [vmem:[#allocation5 + $0xf8] sm:$0xff]
    %v91 = vld [vmem:[#allocation5 + $0x100] sm:$0xff]
    %v92 = vld [vmem:[#allocation5 + $0x108] sm:$0xff]
    %v93 = vld [vmem:[#allocation5 + $0x110] sm:$0xff]
    %v94 = vld [vmem:[#allocation5 + $0x118] sm:$0xff]
    %v95 = vld [vmem:[#allocation5 + $0x120] sm:$0xff]
    %v96 = vld [vmem:[#allocation5 + $0x128] sm:$0xff]
    %v97 = vld [vmem:[#allocation5 + $0x130] sm:$0xff]
    %v98 = vld [vmem:[#allocation5 + $0x138] sm:$0xff]
    %v99 = vld [vmem:[#allocation5 + $0x140] sm:$0xff]
    %v100 = vld [vmem:[#allocation5 + $0x148] sm:$0xff]
    %v101 = vld [vmem:[#allocation5 + $0x150] sm:$0xff]
    %v102 = vld [vmem:[#allocation5 + $0x158] sm:$0xff]
    %v103 = vld [vmem:[#allocation5 + $0x160] sm:$0xff]
    %v104 = vld [vmem:[#allocation5 + $0x168] sm:$0xff]
    %v105 = vld [vmem:[#allocation5 + $0x170] sm:$0xff]
    %v106 = vld [vmem:[#allocation5 + $0x178] sm:$0xff]
    %v107 = vld [vmem:[#allocation5 + $0x180] sm:$0xff]
    %v108 = vld [vmem:[#allocation5 + $0x188] sm:$0xff]
    %v109 = vld [vmem:[#allocation5 + $0x190] sm:$0xff]
    %v110 = vld [vmem:[#allocation5 + $0x198] sm:$0xff]
    %v111 = vld [vmem:[#allocation5 + $0x1a0] sm:$0xff]
    %v112 = vld [vmem:[#allocation5 + $0x1a8] sm:$0xff]
    %v113 = vld [vmem:[#allocation5 + $0x1b0] sm:$0xff]
    %v114 = vld [vmem:[#allocation5 + $0x1b8] sm:$0xff]
    %v115 = vld [vmem:[#allocation5 + $0x1c0] sm:$0xff]
    %v116 = vld [vmem:[#allocation5 + $0x1c8] sm:$0xff]
    %v117 = vld [vmem:[#allocation5 + $0x1d0] sm:$0xff]
    %v118 = vld [vmem:[#allocation5 + $0x1d8] sm:$0xff]
    %v119 = vld [vmem:[#allocation5 + $0x1e0] sm:$0xff]
    %v120 = vld [vmem:[#allocation5 + $0x1e8] sm:$0xff]
    %v121 = vld [vmem:[#allocation5 + $0x1f0] sm:$0xff]
    %v122 = vld [vmem:[#allocation5 + $0x1f8] sm:$0xff]
    %123 = vmatprep.subr.mxu0 %v60
    %124 = vmatpush1.msra.mxu0 %v59
    %125 = vmatprep.subr.mxu0 %v62
    %126 = vmatpush1.msra.mxu0 %v61
    %127 = vmatprep.subr.mxu0 %v64
    %128 = vmatpush1.msra.mxu0 %v63
    %129 = vmatprep.subr.mxu0 %v66
    %130 = vmatpush1.msra.mxu0 %v65
    %131 = vmatprep.subr.mxu0 %v68
    %132 = vmatpush1.msra.mxu0 %v67
    %133 = vmatprep.subr.mxu0 %v70
    %134 = vmatpush1.msra.mxu0 %v69
    %135 = vmatprep.subr.mxu0 %v72
    %136 = vmatpush1.msra.mxu0 %v71
    %137 = vmatprep.subr.mxu0 %v74
    %138 = vmatpush1.msra.mxu0 %v73
    %139 = vmatprep.subr.mxu0 %v76
    %140 = vmatpush1.msra.mxu0 %v75
    %141 = vmatprep.subr.mxu0 %v78
    %142 = vmatpush1.msra.mxu0 %v77
    %143 = vmatprep.subr.mxu0 %v80
    %144 = vmatpush1.msra.mxu0 %v79
    %145 = vmatprep.subr.mxu0 %v82
    %146 = vmatpush1.msra.mxu0 %v81
    %147 = vmatprep.subr.mxu0 %v84
    %148 = vmatpush1.msra.mxu0 %v83
    %149 = vmatprep.subr.mxu0 %v86
    %150 = vmatpush1.msra.mxu0 %v85
    %151 = vmatprep.subr.mxu0 %v88
    %152 = vmatpush1.msra.mxu0 %v87
    %153 = vmatprep.subr.mxu0 %v90
    %154 = vmatpush1.msra.mxu0 %v89
    %155 = vmatprep.subr.mxu0 %v92
    %156 = vmatpush1.msra.mxu0 %v91
    %157 = vmatprep.subr.mxu0 %v94
    %158 = vmatpush1.msra.mxu0 %v93
    %159 = vmatprep.subr.mxu0 %v96
    %160 = vmatpush1.msra.mxu0 %v95
    %161 = vmatprep.subr.mxu0 %v98
    %162 = vmatpush1.msra.mxu0 %v97
    %163 = vmatprep.subr.mxu0 %v100
    %164 = vmatpush1.msra.mxu0 %v99
    %165 = vmatprep.subr.mxu0 %v102
    %166 = vmatpush1.msra.mxu0 %v101
    %167 = vmatprep.subr.mxu0 %v104
    %168 = vmatpush1.msra.mxu0 %v103
    %169 = vmatprep.subr.mxu0 %v106
    %170 = vmatpush1.msra.mxu0 %v105
    %171 = vmatprep.subr.mxu0 %v108
    %172 = vmatpush1.msra.mxu0 %v107
    %173 = vmatprep.subr.mxu0 %v110
    %174 = vmatpush1.msra.mxu0 %v109
    %175 = vmatprep.subr.mxu0 %v112
    %176 = vmatpush1.msra.mxu0 %v111
    %177 = vmatprep.subr.mxu0 %v114
    %178 = vmatpush1.msra.mxu0 %v113
    %179 = vmatprep.subr.mxu0 %v116
    %180 = vmatpush1.msra.mxu0 %v115
    %181 = vmatprep.subr.mxu0 %v118
    %182 = vmatpush1.msra.mxu0 %v117
    %183 = vmatprep.subr.mxu0 %v120
    %184 = vmatpush1.msra.mxu0 %v119
    %185 = vmatprep.subr.mxu0 %v122
    %186 = vmatpush1.msra.mxu0 %v121
    %187 = vmatprep.mubr.f32.mxu0 %v56
    %188 = vmatmul.mubr.f32.gmra.mrb[0].mxu0 %v55
    %v189 = vpop.f32.mrb[0].mxu0
    %v190 = vadd.f32 0.0, %v189
    %v191 = vpop.f32.mrb[0].mxu0
    %v192 = vadd.f32 0.0, %v191
    %193 = vmatprep.mubr.f32.mxu0 %v58
    %194 = vmatmul.mubr.f32.gmra.mrb[0].mxu0 %v57
    %v195 = vpop.f32.mrb[0].mxu0
    %v196 = vadd.f32 0.0, %v195
    %v197 = vpop.f32.mrb[0].mxu0
    %v198 = vadd.f32 0.0, %v197
    %199 = vdwg.mxu0
    %v200 = vadd.f32 %v51, %v190
    %v201 = vadd.f32 %v52, %v192
    %v202 = vadd.f32 %v53, %v196
    %v203 = vadd.f32 %v54, %v198
    %204 = vst [vmem:[#allocation7] sm:$0xff] %v200
    %205 = vst [vmem:[#allocation7 + $0x8] sm:$0xff] %v201
    %206 = vst [vmem:[#allocation7 + $0x10] sm:$0xff] %v202
    %207 = vst [vmem:[#allocation7 + $0x18] sm:$0xff] %v203
    // Predicated region
    $region26: #{tpu_custom_call.1} parent=1 // pred_check
      %p208 = pneg %p43
    $region27: #{tpu_custom_call.1} parent=1 // pred_check_branch
      %210 = sbr.rel (%p208) target = $region29
    $region28: #{tpu_custom_call.1} parent=1 // pred_region
      %v211 = vld [vmem:[#allocation7] sm:$0xff]
      %v212 = vld [vmem:[#allocation7 + $0x8] sm:$0xff]
      %v213 = vld [vmem:[#allocation7 + $0x10] sm:$0xff]
      %v214 = vld [vmem:[#allocation7 + $0x18] sm:$0xff]
      %v215 = vld [vmem:[%s2] sm:$0x3]
      %v217 = vlaneseq
      %v218 = vshrl.u32 %v217, 7
      %v219 = vsub.s32 0, %v218
      %v220 = vrot.slane %v215, %v219
      %v221 = vlaneseq
      %v222 = vshrl.u32 %v221, 7
      %v223 = vsub.s32 1, %v222
      %v224 = vrot.slane %v215, %v223
      %v227 = vadd.f32 %v211, %v220
      %v228 = vadd.f32 %v212, %v224
      %v229 = vadd.f32 %v213, %v220
      %v230 = vadd.f32 %v214, %v224
      %v231 = vmax.f32 %v227, 0.0
      %v232 = vmax.f32 %v228, 0.0
      %v233 = vmax.f32 %v229, 0.0
      %v234 = vmax.f32 %v230, 0.0
      %235 = vst [vmem:[#allocation7] sm:$0xff] %v231
      %236 = vst [vmem:[#allocation7 + $0x8] sm:$0xff] %v232
      %237 = vst [vmem:[#allocation7 + $0x10] sm:$0xff] %v233
      %238 = vst [vmem:[#allocation7 + $0x18] sm:$0xff] %v234
    $region29: #{tpu_custom_call.1} parent=1 // pred_fallthru
      _
    // Predicated region
    $region30: #{tpu_custom_call.1} parent=1 // pred_check
      _
    $region31: #{tpu_custom_call.1} parent=1 // pred_check_branch
      %240 = sbr.rel (0) target = $region33
    $region32: #{tpu_custom_call.1} parent=1 // pred_region
      %s242 = ssub.s32 512, 512
      %243 = vsyncadd [#allocation4], %s242
      %s244 = sshll.u32 [#allocation7], 4
      %s245 = int_to_ptr.vmem [resolvable:$true] %s244
      %250 = dma.vmem_to_hbm [thread:$0]  %s245, 512, %s3, [#allocation4], 256, 256, 16
    $region33: #{tpu_custom_call.1} parent=1 // pred_fallthru
      _
    // Predicated region
    $region34: #{tpu_custom_call.1} parent=1 // pred_check
      _
    $region35: #{tpu_custom_call.1} parent=1 // pred_check_branch
      %252 = sbr.rel (0) target = $region37
    $region36: #{tpu_custom_call.1} parent=1 // pred_region
      %253 = dma.done [#allocation4], 512
    $region37: #{tpu_custom_call.1} parent=1 // pred_fallthru
      _
    %254 = vsyncpa [#allocation3], 1
    %255 = vsyncpa [#allocation6], 1
    %256 = vsyncpa [#allocation4], 1

</llo_original>
